<compile_context>
chip_gen: v7x
topology: tpu7x:2x2x1
jax: 0.10.0
libtpu: 0.0.40
codegen_flags: <defaults>
</compile_context>

<pallas_src>
import functools

import jax
import jax.numpy as jnp
from jax import lax
from jax.experimental import pallas as pl
from jax.experimental.pallas import tpu as pltpu

EPS = 1e-5
_VEC_LANES = 128
_PHASES = 4


def _round_up(n, m):
    return ((n + m - 1) // m) * m


def _sigmoid(x):
    # sigmoid(x) == 0.5*(tanh(x/2)+1): runs on the EUP slot, avoids the VALU divide.
    return 0.5 * (jnp.tanh(0.5 * x) + 1.0)


def _bn_sigmoid(y, s, ss, gamma, beta, inv_b):
    # Training-mode BatchNorm1d from accumulated sum / sum-of-squares, then sigmoid.
    mean = s * inv_b
    var = ss * inv_b - mean * mean
    return _sigmoid((y - mean) * lax.rsqrt(var + EPS) * gamma + beta)


def _mlp_kernel(nb_ref, x_ref, w1_ref, w2_ref, w3_ref, vec_ref, out_ref,
                s1_ref, s2_ref, s3_ref, *, block_b):
    phase = pl.program_id(0)
    tile = pl.program_id(1)

    @pl.when((phase == 0) & (tile == 0))
    def _init():
        s1_ref[...] = jnp.zeros_like(s1_ref)
        s2_ref[...] = jnp.zeros_like(s2_ref)
        s3_ref[...] = jnp.zeros_like(s3_ref)

    n_valid = nb_ref[0]                              # true (unpadded) batch size
    inv_b = 1.0 / n_valid.astype(jnp.float32)

    # Packed small-parameter slab (one VMEM-resident (8,128) tile):
    #   row 0: gamma1(128)  row 1: beta1(128)  row 2: gamma2(64)  row 3: beta2(64)
    #   row 4: gamma3(16)   row 5: beta3(16)   row 6: w4 row(16)  row 7: b4 @ lane 0
    g1 = vec_ref[0:1, :]
    be1 = vec_ref[1:2, :]
    g2 = vec_ref[2:3, 0:64]
    be2 = vec_ref[3:4, 0:64]
    g3 = vec_ref[4:5, 0:16]
    be3 = vec_ref[5:6, 0:16]
    w4r = vec_ref[6:7, 0:16]
    b4 = vec_ref[7:8, 0:1]

    # Valid-row mask for this batch tile: padded rows must not pollute the BN statistics.
    row = lax.broadcasted_iota(jnp.int32, (block_b, 1), 0) + tile * block_b
    mask = (row < n_valid).astype(jnp.float32)       # (block_b, 1)

    x = x_ref[...]                                   # (block_b, d_in), f32 or bf16

    # Layer 1: Linear(d_in -> 128) [bias folded into BN] -- f32 accumulation on the MXU.
    y1 = jnp.dot(x, w1_ref[...], preferred_element_type=jnp.float32)

    @pl.when(phase == 0)
    def _acc1():
        s1_ref[0:1, :] += jnp.sum(y1 * mask, axis=0, keepdims=True)
        s1_ref[1:2, :] += jnp.sum(y1 * y1 * mask, axis=0, keepdims=True)

    a1 = _bn_sigmoid(y1, s1_ref[0:1, :], s1_ref[1:2, :], g1, be1, inv_b)

    # Layer 2: Linear(128 -> 64) + BN + Sigmoid.
    y2 = jnp.dot(a1.astype(w2_ref.dtype), w2_ref[...], preferred_element_type=jnp.float32)

    @pl.when(phase == 1)
    def _acc2():
        s2_ref[0:1, :] += jnp.sum(y2 * mask, axis=0, keepdims=True)
        s2_ref[1:2, :] += jnp.sum(y2 * y2 * mask, axis=0, keepdims=True)

    a2 = _bn_sigmoid(y2, s2_ref[0:1, :], s2_ref[1:2, :], g2, be2, inv_b)

    # Layer 3: Linear(64 -> 16) + BN + Sigmoid.
    y3 = jnp.dot(a2.astype(w3_ref.dtype), w3_ref[...], preferred_element_type=jnp.float32)

    @pl.when(phase == 2)
    def _acc3():
        s3_ref[0:1, :] += jnp.sum(y3 * mask, axis=0, keepdims=True)
        s3_ref[1:2, :] += jnp.sum(y3 * y3 * mask, axis=0, keepdims=True)

    a3 = _bn_sigmoid(y3, s3_ref[0:1, :], s3_ref[1:2, :], g3, be3, inv_b)

    # Final layer: Linear(16 -> 1) + Sigmoid as a VPU multiply + lane reduction (no N=1 matmul).
    logit = jnp.sum(a3 * w4r, axis=-1, keepdims=True) + b4          # (block_b, 1), f32
    # Written every phase; only the last (phase 3) write uses the complete statistics and is
    # the one that ends up in HBM for each block.
    out_ref[...] = _sigmoid(logit)


def _pack_vectors(params):
    """Pack the small per-layer vectors into one (8,128) f32 slab (single fused op)."""
    def _row(v):
        v = jnp.asarray(v, jnp.float32).reshape(-1)
        return jnp.pad(v, (0, _VEC_LANES - v.shape[0]))

    rows = [params["g1"], params["be1"], params["g2"], params["be2"],
            params["g3"], params["be3"], params["w4"][:, 0], params["b4"]]
    return jnp.stack([_row(r) for r in rows], axis=0)


def prepare_params(params, matmul_dtype=jnp.float32):
    """Call ONCE (hoisted out of the forward path). Optionally cast MXU operands to bf16;
    all BN statistics / elementwise math stays f32 inside the kernel (v5e-safe)."""
    return {
        "w1": params["w1"].astype(matmul_dtype),
        "w2": params["w2"].astype(matmul_dtype),
        "w3": params["w3"].astype(matmul_dtype),
        "vec": _pack_vectors(params),
    }


def binary_classifier_forward(x, prep, *, block_b=128):
    """x: (B, input_size) f32.  prep: output of prepare_params()."""
    b, d_in = x.shape
    dt = prep["w1"].dtype

    blk = min(block_b, _round_up(b, 8))          # batch tile (multiple of 8 sublanes)
    b_pad = _round_up(b, blk)
    n_tiles = b_pad // blk

    x_p = x.astype(dt)
    if b_pad != b:
        x_p = jnp.pad(x_p, ((0, b_pad - b), (0, 0)))
    nb = jnp.array([b], jnp.int32)               # true batch size -> SMEM scalar prefetch

    grid_spec = pltpu.PrefetchScalarGridSpec(
        num_scalar_prefetch=1,
        grid=(_PHASES, n_tiles),
        in_specs=[
            pl.BlockSpec((blk, d_in), lambda p, i, nb: (i, 0)),      # x: streamed per tile
            pl.BlockSpec((d_in, 128), lambda p, i, nb: (0, 0)),      # w1: VMEM-resident
            pl.BlockSpec((128, 64), lambda p, i, nb: (0, 0)),        # w2: VMEM-resident
            pl.BlockSpec((64, 16), lambda p, i, nb: (0, 0)),         # w3: VMEM-resident
            pl.BlockSpec((8, _VEC_LANES), lambda p, i, nb: (0, 0)),  # slab: VMEM-resident
        ],
        out_specs=pl.BlockSpec((blk, 1), lambda p, i, nb: (i, 0)),
        scratch_shapes=[
            pltpu.VMEM((2, 128), jnp.float32),   # layer-1 sum / sumsq
            pltpu.VMEM((2, 64), jnp.float32),    # layer-2 sum / sumsq
            pltpu.VMEM((2, 16), jnp.float32),    # layer-3 sum / sumsq
        ],
    )

    out = pl.pallas_call(
        functools.partial(_mlp_kernel, block_b=blk),
        grid_spec=grid_spec,
        out_shape=jax.ShapeDtypeStruct((b_pad, 1), jnp.float32),
        compiler_params=pltpu.CompilerParams(
            dimension_semantics=("arbitrary", "arbitrary")),
    )(nb, x_p, prep["w1"], prep["w2"], prep["w3"], prep["vec"])

    return out[:b]                               # (B, 1)


def init_params(key, input_size):
    """PyTorch-style init: Linear weights/biases ~ U(-1/sqrt(fan_in), 1/sqrt(fan_in));
    BN gamma=1, beta=0. Weights stored as (in, out); biases/gamma/beta as (1, out)."""
    dims = [(input_size, 128), (128, 64), (64, 16), (16, 1)]
    params = {}
    keys = jax.random.split(key, 2 * len(dims))
    for i, (fan_in, fan_out) in enumerate(dims):
        bound = 1.0 / jnp.sqrt(float(fan_in))
        params[f"w{i + 1}"] = jax.random.uniform(
            keys[2 * i], (fan_in, fan_out), jnp.float32, -bound, bound)
        params[f"b{i + 1}"] = jax.random.uniform(
            keys[2 * i + 1], (1, fan_out), jnp.float32, -bound, bound)
        if i < 3:  # BN layers follow the first three Linear layers
            params[f"g{i + 1}"] = jnp.ones((1, fan_out), jnp.float32)
            params[f"be{i + 1}"] = jnp.zeros((1, fan_out), jnp.float32)
    return params


def _bn_ref(y, gamma, beta):
    mean = jnp.mean(y, axis=0, keepdims=True)
    var = jnp.mean((y - mean) ** 2, axis=0, keepdims=True)
    return (y - mean) * lax.rsqrt(var + EPS) * gamma + beta


def _reference_forward(x, params):
    """Pure-JAX f32 reference mirroring the PyTorch forward exactly (biases included,
    training-mode BatchNorm) — validates the in-kernel simplifications."""
    y = x @ params["w1"] + params["b1"]
    y = jax.nn.sigmoid(_bn_ref(y, params["g1"], params["be1"]))
    y = y @ params["w2"] + params["b2"]
    y = jax.nn.sigmoid(_bn_ref(y, params["g2"], params["be2"]))
    y = y @ params["w3"] + params["b3"]
    y = jax.nn.sigmoid(_bn_ref(y, params["g3"], params["be3"]))
    y = y @ params["w4"] + params["b4"]
    return jax.nn.sigmoid(y)


if __name__ == "__main__":
    key = jax.random.PRNGKey(0)
    k_x, k_p = jax.random.split(key)

    BATCH = 16
    INPUT_SIZE = 32

    x = jax.random.normal(k_x, (BATCH, INPUT_SIZE), jnp.float32)
    params = init_params(k_p, INPUT_SIZE)

    # f32 MXU path, forced multi-tile (block_b=8 -> 2 batch tiles) to exercise the grid,
    # cross-tile BN accumulation, and resident-weight index maps.
    prep_f32 = prepare_params(params, jnp.float32)
    out = jax.block_until_ready(binary_classifier_forward(x, prep_f32, block_b=8))
    ref = _reference_forward(x, params)
    assert out.shape == (BATCH, 1), out.shape
    assert jnp.allclose(out, ref, atol=1e-4, rtol=1e-4), "f32 kernel mismatch vs reference"

    # Odd batch size (13) -> exercises padding + masked BN statistics.
    x_odd = x[:13]
    out_odd = jax.block_until_ready(binary_classifier_forward(x_odd, prep_f32, block_b=8))
    ref_odd = _reference_forward(x_odd, params)
    assert out_odd.shape == (13, 1), out_odd.shape
    assert jnp.allclose(out_odd, ref_odd, atol=1e-4, rtol=1e-4), "padded-batch mismatch"

    # bf16 MXU operands (v6e/v7x-friendly); BN stats / sigmoid stay f32 inside the kernel.
    prep_bf16 = prepare_params(params, jnp.bfloat16)
    out_bf16 = jax.block_until_ready(binary_classifier_forward(x, prep_bf16))
    assert out_bf16.shape == (BATCH, 1), out_bf16.shape
    assert jnp.allclose(out_bf16, ref, atol=5e-2), "bf16 kernel mismatch vs reference"

    print("KERNEL_OK")
</pallas_src>

<mosaic_0001>
module attributes {stable_mosaic.version = 11 : i64} {
  func.func @_mlp_kernel(%arg0: i32, %arg1: i32, %arg2: memref<1xi32, #tpu.memory_space<smem>>, %arg3: memref<8x32xf32, #tpu.memory_space<vmem>>, %arg4: memref<32x128xf32, #tpu.memory_space<vmem>>, %arg5: memref<128x64xf32, #tpu.memory_space<vmem>>, %arg6: memref<64x16xf32, #tpu.memory_space<vmem>>, %arg7: memref<8x128xf32, #tpu.memory_space<vmem>>, %arg8: memref<8x1xf32, #tpu.memory_space<vmem>>, %arg9: memref<2x128xf32, #tpu.memory_space<vmem>>, %arg10: memref<2x64xf32, #tpu.memory_space<vmem>>, %arg11: memref<2x16xf32, #tpu.memory_space<vmem>>) attributes {dimension_semantics = [#tpu.dimension_semantics<arbitrary>, #tpu.dimension_semantics<arbitrary>], iteration_bounds = array<i64: 4, 2>, scalar_prefetch = 1 : i64, scratch_operands = 3 : i64, tpu.core_type = #tpu.core_type<tc>, window_params = [{transform_indices = @transform_0, window_bounds = array<i64: 8, 32>}, {pipeline_mode = #tpu.pipeline_mode<synchronous>, transform_indices = @transform_1, window_bounds = array<i64: 32, 128>}, {pipeline_mode = #tpu.pipeline_mode<synchronous>, transform_indices = @transform_2, window_bounds = array<i64: 128, 64>}, {pipeline_mode = #tpu.pipeline_mode<synchronous>, transform_indices = @transform_3, window_bounds = array<i64: 64, 16>}, {pipeline_mode = #tpu.pipeline_mode<synchronous>, transform_indices = @transform_4, window_bounds = array<i64: 8, 128>}, {transform_indices = @transform_5, window_bounds = array<i64: 8, 1>}]} {
    %c0_i32 = arith.constant 0 : i32
    %0 = arith.cmpi eq, %arg0, %c0_i32 : i32
    %c0_i32_0 = arith.constant 0 : i32
    %1 = arith.cmpi eq, %arg1, %c0_i32_0 : i32
    %2 = arith.andi %0, %1 : i1
    %3 = arith.extui %2 : i1 to i32
    %c0_i32_1 = arith.constant 0 : i32
    %4 = arith.cmpi ne, %3, %c0_i32_1 : i32
    scf.if %4 {
      %cst_56 = arith.constant 0.000000e+00 : f32
      %132 = vector.broadcast %cst_56 : f32 to vector<2x128xf32>
      %c0_57 = arith.constant 0 : index
      %c0_58 = arith.constant 0 : index
      %133 = vector.load %arg9[%c0_57, %c0_58] : memref<2x128xf32, #tpu.memory_space<vmem>>, vector<2x128xf32>
      tpu.vector_store %arg9[%c0_57, %c0_58], %132 {strides = array<i32>} : memref<2x128xf32, #tpu.memory_space<vmem>>, vector<2x128xf32>,
      %cst_59 = arith.constant 0.000000e+00 : f32
      %134 = vector.broadcast %cst_59 : f32 to vector<2x64xf32>
      %c0_60 = arith.constant 0 : index
      %c0_61 = arith.constant 0 : index
      %135 = vector.load %arg10[%c0_60, %c0_61] : memref<2x64xf32, #tpu.memory_space<vmem>>, vector<2x64xf32>
      tpu.vector_store %arg10[%c0_60, %c0_61], %134 {strides = array<i32>} : memref<2x64xf32, #tpu.memory_space<vmem>>, vector<2x64xf32>,
      %cst_62 = arith.constant 0.000000e+00 : f32
      %136 = vector.broadcast %cst_62 : f32 to vector<2x16xf32>
      %c0_63 = arith.constant 0 : index
      %c0_64 = arith.constant 0 : index
      %137 = vector.load %arg11[%c0_63, %c0_64] : memref<2x16xf32, #tpu.memory_space<vmem>>, vector<2x16xf32>
      tpu.vector_store %arg11[%c0_63, %c0_64], %136 {strides = array<i32>} : memref<2x16xf32, #tpu.memory_space<vmem>>, vector<2x16xf32>,
    } else {
    }
    %c0 = arith.constant 0 : index
    %5 = memref.load %arg2[%c0] : memref<1xi32, #tpu.memory_space<smem>>
    %6 = arith.sitofp %5 : i32 to f32
    %cst = arith.constant 1.000000e+00 : f32
    %7 = arith.divf %cst, %6 : f32
    %c0_2 = arith.constant 0 : index
    %c0_3 = arith.constant 0 : index
    %8 = vector.load %arg7[%c0_2, %c0_3] : memref<8x128xf32, #tpu.memory_space<vmem>>, vector<1x128xf32>
    %c1 = arith.constant 1 : index
    %c0_4 = arith.constant 0 : index
    %9 = vector.load %arg7[%c1, %c0_4] : memref<8x128xf32, #tpu.memory_space<vmem>>, vector<1x128xf32>
    %c2 = arith.constant 2 : index
    %c0_5 = arith.constant 0 : index
    %10 = vector.load %arg7[%c2, %c0_5] : memref<8x128xf32, #tpu.memory_space<vmem>>, vector<1x64xf32>
    %c3 = arith.constant 3 : index
    %c0_6 = arith.constant 0 : index
    %11 = vector.load %arg7[%c3, %c0_6] : memref<8x128xf32, #tpu.memory_space<vmem>>, vector<1x64xf32>
    %c4 = arith.constant 4 : index
    %c0_7 = arith.constant 0 : index
    %12 = vector.load %arg7[%c4, %c0_7] : memref<8x128xf32, #tpu.memory_space<vmem>>, vector<1x16xf32>
    %c5 = arith.constant 5 : index
    %c0_8 = arith.constant 0 : index
    %13 = vector.load %arg7[%c5, %c0_8] : memref<8x128xf32, #tpu.memory_space<vmem>>, vector<1x16xf32>
    %c6 = arith.constant 6 : index
    %c0_9 = arith.constant 0 : index
    %14 = vector.load %arg7[%c6, %c0_9] : memref<8x128xf32, #tpu.memory_space<vmem>>, vector<1x16xf32>
    %c7 = arith.constant 7 : index
    %c0_10 = arith.constant 0 : index
    %15 = vector.load %arg7[%c7, %c0_10] : memref<8x128xf32, #tpu.memory_space<vmem>>, vector<1x1xf32>
    %16 = tpu.iota {dimensions = array<i32: 0>} : vector<8x1xi32>
    %c8_i32 = arith.constant 8 : i32
    %17 = arith.muli %arg1, %c8_i32 : i32
    %18 = vector.broadcast %17 : i32 to vector<8x1xi32>
    %19 = arith.addi %16, %18 : vector<8x1xi32>
    %20 = vector.broadcast %5 : i32 to vector<8x1xi32>
    %21 = arith.cmpi slt, %19, %20 : vector<8x1xi32>
    %22 = arith.extui %21 : vector<8x1xi1> to vector<8x1xi32>
    %23 = arith.sitofp %22 : vector<8x1xi32> to vector<8x1xf32>
    %c0_11 = arith.constant 0 : index
    %c0_12 = arith.constant 0 : index
    %24 = vector.load %arg3[%c0_11, %c0_12] : memref<8x32xf32, #tpu.memory_space<vmem>>, vector<8x32xf32>
    %c0_13 = arith.constant 0 : index
    %c0_14 = arith.constant 0 : index
    %25 = vector.load %arg4[%c0_13, %c0_14] : memref<32x128xf32, #tpu.memory_space<vmem>>, vector<32x128xf32>
    %cst_15 = arith.constant dense<0.000000e+00> : vector<8x128xf32>
    %26 = tpu.matmul %24, %25, %cst_15 {dimension_numbers = #tpu.dot_dimension_numbers<[1], [0], [0], [1], [0, 0, 1, 1], [], []>} : vector<8x32xf32>, vector<32x128xf32>, vector<8x128xf32> -> vector<8x128xf32>
    %c0_i32_16 = arith.constant 0 : i32
    %27 = arith.cmpi eq, %arg0, %c0_i32_16 : i32
    %28 = arith.extui %27 : i1 to i32
    %c0_i32_17 = arith.constant 0 : i32
    %29 = arith.cmpi ne, %28, %c0_i32_17 : i32
    scf.if %29 {
      %c0_56 = arith.constant 0 : index
      %c0_57 = arith.constant 0 : index
      %132 = vector.load %arg9[%c0_56, %c0_57] : memref<2x128xf32, #tpu.memory_space<vmem>>, vector<1x128xf32>
      %133 = vector.broadcast %23 : vector<8x1xf32> to vector<8x128xf32>
      %134 = arith.mulf %26, %133 : vector<8x128xf32>
      %cst_58 = arith.constant dense<0.000000e+00> : vector<128xf32>
      %135 = vector.multi_reduction <add>, %134, %cst_58 [0] : vector<8x128xf32> to vector<128xf32>
      %136 = vector.shape_cast %135 : vector<128xf32> to vector<1x128xf32>
      %137 = arith.addf %132, %136 : vector<1x128xf32>
      %c0_59 = arith.constant 0 : index
      %c0_60 = arith.constant 0 : index
      %138 = vector.load %arg9[%c0_59, %c0_60] : memref<2x128xf32, #tpu.memory_space<vmem>>, vector<1x128xf32>
      tpu.vector_store %arg9[%c0_59, %c0_60], %137 {strides = array<i32>} : memref<2x128xf32, #tpu.memory_space<vmem>>, vector<1x128xf32>,
      %c1_61 = arith.constant 1 : index
      %c0_62 = arith.constant 0 : index
      %139 = vector.load %arg9[%c1_61, %c0_62] : memref<2x128xf32, #tpu.memory_space<vmem>>, vector<1x128xf32>
      %140 = arith.mulf %26, %26 : vector<8x128xf32>
      %141 = vector.broadcast %23 : vector<8x1xf32> to vector<8x128xf32>
      %142 = arith.mulf %140, %141 : vector<8x128xf32>
      %cst_63 = arith.constant dense<0.000000e+00> : vector<128xf32>
      %143 = vector.multi_reduction <add>, %142, %cst_63 [0] : vector<8x128xf32> to vector<128xf32>
      %144 = vector.shape_cast %143 : vector<128xf32> to vector<1x128xf32>
      %145 = arith.addf %139, %144 : vector<1x128xf32>
      %c1_64 = arith.constant 1 : index
      %c0_65 = arith.constant 0 : index
      %146 = vector.load %arg9[%c1_64, %c0_65] : memref<2x128xf32, #tpu.memory_space<vmem>>, vector<1x128xf32>
      tpu.vector_store %arg9[%c1_64, %c0_65], %145 {strides = array<i32>} : memref<2x128xf32, #tpu.memory_space<vmem>>, vector<1x128xf32>,
    } else {
    }
    %c0_18 = arith.constant 0 : index
    %c0_19 = arith.constant 0 : index
    %30 = vector.load %arg9[%c0_18, %c0_19] : memref<2x128xf32, #tpu.memory_space<vmem>>, vector<1x128xf32>
    %c1_20 = arith.constant 1 : index
    %c0_21 = arith.constant 0 : index
    %31 = vector.load %arg9[%c1_20, %c0_21] : memref<2x128xf32, #tpu.memory_space<vmem>>, vector<1x128xf32>
    %32 = vector.broadcast %7 : f32 to vector<1x128xf32>
    %33 = arith.mulf %30, %32 : vector<1x128xf32>
    %34 = vector.broadcast %7 : f32 to vector<1x128xf32>
    %35 = arith.mulf %31, %34 : vector<1x128xf32>
    %36 = arith.mulf %33, %33 : vector<1x128xf32>
    %37 = arith.subf %35, %36 : vector<1x128xf32>
    %38 = vector.broadcast %33 : vector<1x128xf32> to vector<8x128xf32>
    %39 = arith.subf %26, %38 : vector<8x128xf32>
    %cst_22 = arith.constant 9.99999974E-6 : f32
    %40 = vector.broadcast %cst_22 : f32 to vector<1x128xf32>
    %41 = arith.addf %37, %40 : vector<1x128xf32>
    %42 = math.rsqrt %41 : vector<1x128xf32>
    %43 = vector.broadcast %42 : vector<1x128xf32> to vector<8x128xf32>
    %44 = arith.mulf %39, %43 : vector<8x128xf32>
    %45 = vector.broadcast %8 : vector<1x128xf32> to vector<8x128xf32>
    %46 = arith.mulf %44, %45 : vector<8x128xf32>
    %47 = vector.broadcast %9 : vector<1x128xf32> to vector<8x128xf32>
    %48 = arith.addf %46, %47 : vector<8x128xf32>
    %cst_23 = arith.constant 5.000000e-01 : f32
    %49 = vector.broadcast %cst_23 : f32 to vector<8x128xf32>
    %50 = arith.mulf %49, %48 : vector<8x128xf32>
    %51 = math.tanh %50 : vector<8x128xf32>
    %cst_24 = arith.constant 1.000000e+00 : f32
    %52 = vector.broadcast %cst_24 : f32 to vector<8x128xf32>
    %53 = arith.addf %51, %52 : vector<8x128xf32>
    %cst_25 = arith.constant 5.000000e-01 : f32
    %54 = vector.broadcast %cst_25 : f32 to vector<8x128xf32>
    %55 = arith.mulf %54, %53 : vector<8x128xf32>
    %c0_26 = arith.constant 0 : index
    %c0_27 = arith.constant 0 : index
    %56 = vector.load %arg5[%c0_26, %c0_27] : memref<128x64xf32, #tpu.memory_space<vmem>>, vector<128x64xf32>
    %cst_28 = arith.constant dense<0.000000e+00> : vector<8x64xf32>
    %57 = tpu.matmul %55, %56, %cst_28 {dimension_numbers = #tpu.dot_dimension_numbers<[1], [0], [0], [1], [0, 0, 1, 1], [], []>} : vector<8x128xf32>, vector<128x64xf32>, vector<8x64xf32> -> vector<8x64xf32>
    %c1_i32 = arith.constant 1 : i32
    %58 = arith.cmpi eq, %arg0, %c1_i32 : i32
    %59 = arith.extui %58 : i1 to i32
    %c0_i32_29 = arith.constant 0 : i32
    %60 = arith.cmpi ne, %59, %c0_i32_29 : i32
    scf.if %60 {
      %c0_56 = arith.constant 0 : index
      %c0_57 = arith.constant 0 : index
      %132 = vector.load %arg10[%c0_56, %c0_57] : memref<2x64xf32, #tpu.memory_space<vmem>>, vector<1x64xf32>
      %133 = vector.broadcast %23 : vector<8x1xf32> to vector<8x64xf32>
      %134 = arith.mulf %57, %133 : vector<8x64xf32>
      %cst_58 = arith.constant dense<0.000000e+00> : vector<64xf32>
      %135 = vector.multi_reduction <add>, %134, %cst_58 [0] : vector<8x64xf32> to vector<64xf32>
      %136 = vector.shape_cast %135 : vector<64xf32> to vector<1x64xf32>
      %137 = arith.addf %132, %136 : vector<1x64xf32>
      %c0_59 = arith.constant 0 : index
      %c0_60 = arith.constant 0 : index
      %138 = vector.load %arg10[%c0_59, %c0_60] : memref<2x64xf32, #tpu.memory_space<vmem>>, vector<1x64xf32>
      tpu.vector_store %arg10[%c0_59, %c0_60], %137 {strides = array<i32>} : memref<2x64xf32, #tpu.memory_space<vmem>>, vector<1x64xf32>,
      %c1_61 = arith.constant 1 : index
      %c0_62 = arith.constant 0 : index
      %139 = vector.load %arg10[%c1_61, %c0_62] : memref<2x64xf32, #tpu.memory_space<vmem>>, vector<1x64xf32>
      %140 = arith.mulf %57, %57 : vector<8x64xf32>
      %141 = vector.broadcast %23 : vector<8x1xf32> to vector<8x64xf32>
      %142 = arith.mulf %140, %141 : vector<8x64xf32>
      %cst_63 = arith.constant dense<0.000000e+00> : vector<64xf32>
      %143 = vector.multi_reduction <add>, %142, %cst_63 [0] : vector<8x64xf32> to vector<64xf32>
      %144 = vector.shape_cast %143 : vector<64xf32> to vector<1x64xf32>
      %145 = arith.addf %139, %144 : vector<1x64xf32>
      %c1_64 = arith.constant 1 : index
      %c0_65 = arith.constant 0 : index
      %146 = vector.load %arg10[%c1_64, %c0_65] : memref<2x64xf32, #tpu.memory_space<vmem>>, vector<1x64xf32>
      tpu.vector_store %arg10[%c1_64, %c0_65], %145 {strides = array<i32>} : memref<2x64xf32, #tpu.memory_space<vmem>>, vector<1x64xf32>,
    } else {
    }
    %c0_30 = arith.constant 0 : index
    %c0_31 = arith.constant 0 : index
    %61 = vector.load %arg10[%c0_30, %c0_31] : memref<2x64xf32, #tpu.memory_space<vmem>>, vector<1x64xf32>
    %c1_32 = arith.constant 1 : index
    %c0_33 = arith.constant 0 : index
    %62 = vector.load %arg10[%c1_32, %c0_33] : memref<2x64xf32, #tpu.memory_space<vmem>>, vector<1x64xf32>
    %63 = vector.broadcast %7 : f32 to vector<1x64xf32>
    %64 = arith.mulf %61, %63 : vector<1x64xf32>
    %65 = vector.broadcast %7 : f32 to vector<1x64xf32>
    %66 = arith.mulf %62, %65 : vector<1x64xf32>
    %67 = arith.mulf %64, %64 : vector<1x64xf32>
    %68 = arith.subf %66, %67 : vector<1x64xf32>
    %69 = vector.broadcast %64 : vector<1x64xf32> to vector<8x64xf32>
    %70 = arith.subf %57, %69 : vector<8x64xf32>
    %cst_34 = arith.constant 9.99999974E-6 : f32
    %71 = vector.broadcast %cst_34 : f32 to vector<1x64xf32>
    %72 = arith.addf %68, %71 : vector<1x64xf32>
    %73 = math.rsqrt %72 : vector<1x64xf32>
    %74 = vector.broadcast %73 : vector<1x64xf32> to vector<8x64xf32>
    %75 = arith.mulf %70, %74 : vector<8x64xf32>
    %76 = vector.broadcast %10 : vector<1x64xf32> to vector<8x64xf32>
    %77 = arith.mulf %75, %76 : vector<8x64xf32>
    %78 = vector.broadcast %11 : vector<1x64xf32> to vector<8x64xf32>
    %79 = arith.addf %77, %78 : vector<8x64xf32>
    %cst_35 = arith.constant 5.000000e-01 : f32
    %80 = vector.broadcast %cst_35 : f32 to vector<8x64xf32>
    %81 = arith.mulf %80, %79 : vector<8x64xf32>
    %82 = math.tanh %81 : vector<8x64xf32>
    %cst_36 = arith.constant 1.000000e+00 : f32
    %83 = vector.broadcast %cst_36 : f32 to vector<8x64xf32>
    %84 = arith.addf %82, %83 : vector<8x64xf32>
    %cst_37 = arith.constant 5.000000e-01 : f32
    %85 = vector.broadcast %cst_37 : f32 to vector<8x64xf32>
    %86 = arith.mulf %85, %84 : vector<8x64xf32>
    %c0_38 = arith.constant 0 : index
    %c0_39 = arith.constant 0 : index
    %87 = vector.load %arg6[%c0_38, %c0_39] : memref<64x16xf32, #tpu.memory_space<vmem>>, vector<64x16xf32>
    %cst_40 = arith.constant dense<0.000000e+00> : vector<8x16xf32>
    %88 = tpu.matmul %86, %87, %cst_40 {dimension_numbers = #tpu.dot_dimension_numbers<[1], [0], [0], [1], [0, 0, 1, 1], [], []>} : vector<8x64xf32>, vector<64x16xf32>, vector<8x16xf32> -> vector<8x16xf32>
    %c2_i32 = arith.constant 2 : i32
    %89 = arith.cmpi eq, %arg0, %c2_i32 : i32
    %90 = arith.extui %89 : i1 to i32
    %c0_i32_41 = arith.constant 0 : i32
    %91 = arith.cmpi ne, %90, %c0_i32_41 : i32
    scf.if %91 {
      %c0_56 = arith.constant 0 : index
      %c0_57 = arith.constant 0 : index
      %132 = vector.load %arg11[%c0_56, %c0_57] : memref<2x16xf32, #tpu.memory_space<vmem>>, vector<1x16xf32>
      %133 = vector.broadcast %23 : vector<8x1xf32> to vector<8x16xf32>
      %134 = arith.mulf %88, %133 : vector<8x16xf32>
      %cst_58 = arith.constant dense<0.000000e+00> : vector<16xf32>
      %135 = vector.multi_reduction <add>, %134, %cst_58 [0] : vector<8x16xf32> to vector<16xf32>
      %136 = vector.shape_cast %135 : vector<16xf32> to vector<1x16xf32>
      %137 = arith.addf %132, %136 : vector<1x16xf32>
      %c0_59 = arith.constant 0 : index
      %c0_60 = arith.constant 0 : index
      %138 = vector.load %arg11[%c0_59, %c0_60] : memref<2x16xf32, #tpu.memory_space<vmem>>, vector<1x16xf32>
      tpu.vector_store %arg11[%c0_59, %c0_60], %137 {strides = array<i32>} : memref<2x16xf32, #tpu.memory_space<vmem>>, vector<1x16xf32>,
      %c1_61 = arith.constant 1 : index
      %c0_62 = arith.constant 0 : index
      %139 = vector.load %arg11[%c1_61, %c0_62] : memref<2x16xf32, #tpu.memory_space<vmem>>, vector<1x16xf32>
      %140 = arith.mulf %88, %88 : vector<8x16xf32>
      %141 = vector.broadcast %23 : vector<8x1xf32> to vector<8x16xf32>
      %142 = arith.mulf %140, %141 : vector<8x16xf32>
      %cst_63 = arith.constant dense<0.000000e+00> : vector<16xf32>
      %143 = vector.multi_reduction <add>, %142, %cst_63 [0] : vector<8x16xf32> to vector<16xf32>
      %144 = vector.shape_cast %143 : vector<16xf32> to vector<1x16xf32>
      %145 = arith.addf %139, %144 : vector<1x16xf32>
      %c1_64 = arith.constant 1 : index
      %c0_65 = arith.constant 0 : index
      %146 = vector.load %arg11[%c1_64, %c0_65] : memref<2x16xf32, #tpu.memory_space<vmem>>, vector<1x16xf32>
      tpu.vector_store %arg11[%c1_64, %c0_65], %145 {strides = array<i32>} : memref<2x16xf32, #tpu.memory_space<vmem>>, vector<1x16xf32>,
    } else {
    }
    %c0_42 = arith.constant 0 : index
    %c0_43 = arith.constant 0 : index
    %92 = vector.load %arg11[%c0_42, %c0_43] : memref<2x16xf32, #tpu.memory_space<vmem>>, vector<1x16xf32>
    %c1_44 = arith.constant 1 : index
    %c0_45 = arith.constant 0 : index
    %93 = vector.load %arg11[%c1_44, %c0_45] : memref<2x16xf32, #tpu.memory_space<vmem>>, vector<1x16xf32>
    %94 = vector.broadcast %7 : f32 to vector<1x16xf32>
    %95 = arith.mulf %92, %94 : vector<1x16xf32>
    %96 = vector.broadcast %7 : f32 to vector<1x16xf32>
    %97 = arith.mulf %93, %96 : vector<1x16xf32>
    %98 = arith.mulf %95, %95 : vector<1x16xf32>
    %99 = arith.subf %97, %98 : vector<1x16xf32>
    %100 = vector.broadcast %95 : vector<1x16xf32> to vector<8x16xf32>
    %101 = arith.subf %88, %100 : vector<8x16xf32>
    %cst_46 = arith.constant 9.99999974E-6 : f32
    %102 = vector.broadcast %cst_46 : f32 to vector<1x16xf32>
    %103 = arith.addf %99, %102 : vector<1x16xf32>
    %104 = math.rsqrt %103 : vector<1x16xf32>
    %105 = vector.broadcast %104 : vector<1x16xf32> to vector<8x16xf32>
    %106 = arith.mulf %101, %105 : vector<8x16xf32>
    %107 = vector.broadcast %12 : vector<1x16xf32> to vector<8x16xf32>
    %108 = arith.mulf %106, %107 : vector<8x16xf32>
    %109 = vector.broadcast %13 : vector<1x16xf32> to vector<8x16xf32>
    %110 = arith.addf %108, %109 : vector<8x16xf32>
    %cst_47 = arith.constant 5.000000e-01 : f32
    %111 = vector.broadcast %cst_47 : f32 to vector<8x16xf32>
    %112 = arith.mulf %111, %110 : vector<8x16xf32>
    %113 = math.tanh %112 : vector<8x16xf32>
    %cst_48 = arith.constant 1.000000e+00 : f32
    %114 = vector.broadcast %cst_48 : f32 to vector<8x16xf32>
    %115 = arith.addf %113, %114 : vector<8x16xf32>
    %cst_49 = arith.constant 5.000000e-01 : f32
    %116 = vector.broadcast %cst_49 : f32 to vector<8x16xf32>
    %117 = arith.mulf %116, %115 : vector<8x16xf32>
    %118 = vector.broadcast %14 : vector<1x16xf32> to vector<8x16xf32>
    %119 = arith.mulf %117, %118 : vector<8x16xf32>
    %cst_50 = arith.constant dense<0.000000e+00> : vector<8xf32>
    %120 = vector.multi_reduction <add>, %119, %cst_50 [1] : vector<8x16xf32> to vector<8xf32>
    %121 = vector.shape_cast %120 : vector<8xf32> to vector<8x1xf32>
    %122 = vector.broadcast %15 : vector<1x1xf32> to vector<8x1xf32>
    %123 = arith.addf %121, %122 : vector<8x1xf32>
    %cst_51 = arith.constant 5.000000e-01 : f32
    %124 = vector.broadcast %cst_51 : f32 to vector<8x1xf32>
    %125 = arith.mulf %124, %123 : vector<8x1xf32>
    %126 = math.tanh %125 : vector<8x1xf32>
    %cst_52 = arith.constant 1.000000e+00 : f32
    %127 = vector.broadcast %cst_52 : f32 to vector<8x1xf32>
    %128 = arith.addf %126, %127 : vector<8x1xf32>
    %cst_53 = arith.constant 5.000000e-01 : f32
    %129 = vector.broadcast %cst_53 : f32 to vector<8x1xf32>
    %130 = arith.mulf %129, %128 : vector<8x1xf32>
    %c0_54 = arith.constant 0 : index
    %c0_55 = arith.constant 0 : index
    %131 = vector.load %arg8[%c0_54, %c0_55] : memref<8x1xf32, #tpu.memory_space<vmem>>, vector<8x1xf32>
    tpu.vector_store %arg8[%c0_54, %c0_55], %130 {strides = array<i32>} : memref<8x1xf32, #tpu.memory_space<vmem>>, vector<8x1xf32>,
    return
  }
  func.func @transform_0(%arg0: i32, %arg1: i32, %arg2: memref<1xi32, #tpu.memory_space<smem>>) -> (i32, i32) {
    %c0_i32 = arith.constant 0 : i32
    %c0_i32_0 = arith.constant 0 : i32
    return %arg1, %c0_i32 : i32, i32
  }
  func.func @transform_1(%arg0: i32, %arg1: i32, %arg2: memref<1xi32, #tpu.memory_space<smem>>) -> (i32, i32) {
    %c0_i32 = arith.constant 0 : i32
    %c0_i32_0 = arith.constant 0 : i32
    %c0_i32_1 = arith.constant 0 : i32
    return %c0_i32, %c0_i32_0 : i32, i32
  }
  func.func @transform_2(%arg0: i32, %arg1: i32, %arg2: memref<1xi32, #tpu.memory_space<smem>>) -> (i32, i32) {
    %c0_i32 = arith.constant 0 : i32
    %c0_i32_0 = arith.constant 0 : i32
    %c0_i32_1 = arith.constant 0 : i32
    return %c0_i32, %c0_i32_0 : i32, i32
  }
  func.func @transform_3(%arg0: i32, %arg1: i32, %arg2: memref<1xi32, #tpu.memory_space<smem>>) -> (i32, i32) {
    %c0_i32 = arith.constant 0 : i32
    %c0_i32_0 = arith.constant 0 : i32
    %c0_i32_1 = arith.constant 0 : i32
    return %c0_i32, %c0_i32_0 : i32, i32
  }
  func.func @transform_4(%arg0: i32, %arg1: i32, %arg2: memref<1xi32, #tpu.memory_space<smem>>) -> (i32, i32) {
    %c0_i32 = arith.constant 0 : i32
    %c0_i32_0 = arith.constant 0 : i32
    %c0_i32_1 = arith.constant 0 : i32
    return %c0_i32, %c0_i32_0 : i32, i32
  }
  func.func @transform_5(%arg0: i32, %arg1: i32, %arg2: memref<1xi32, #tpu.memory_space<smem>>) -> (i32, i32) {
    %c0_i32 = arith.constant 0 : i32
    %c0_i32_0 = arith.constant 0 : i32
    return %arg1, %c0_i32 : i32, i32
  }
}

</mosaic_0001>

<llo_original>
// kernel: tpu_custom_call.1
$region0: #{tpu_custom_call.1}
  #allocation0 [shape = 'u32[]', space=smem, size = 0x4, offset = 0x4, fixed_abs, tag = 'smem constant byte address 0x4 - core index']
  #allocation1 [shape = 'u32[144,128]{1,0:T(1,128)}', space=vmem, size = 0x12000, scoped, tag = 'internal scratch']
  #allocation2 [shape = 'f32[2,128]{1,0:T(2,128)}', space=vmem, size = 0x400, scoped, tag = 'scratch operand']
  #allocation3 [shape = 'f32[2,64]{1,0:T(2,128)}', space=vmem, size = 0x400, scoped, tag = 'scratch operand']
  #allocation4 [shape = 'f32[2,16]{1,0:T(2,128)}', space=vmem, size = 0x400, scoped, tag = 'scratch operand']
  #allocation5 [shape = 's32[1]{0}', space=sflag, size = 0x4, scoped, tag = 'scoped memory for tpu_custom_call.1']
  #allocation6 [shape = 's32[1]{0:T(128)S(6)}', space=smem, size = 0x200, scoped, tag = 'prefetched SMEM operand 0']
  %s0 = inlined_call_operand.<no memory space> [shape: s32[1], index: 0, kind: input, shape index: {}]
  %s1 = inlined_call_operand.vmem [shape: f32[16,32], index: 1, kind: input, shape index: {}]
  %s2 = inlined_call_operand.vmem [shape: f32[32,128], index: 2, kind: input, shape index: {}]
  %s3 = inlined_call_operand.vmem [shape: f32[128,64], index: 3, kind: input, shape index: {}]
  %s4 = inlined_call_operand.vmem [shape: f32[64,16], index: 4, kind: input, shape index: {}]
  %s5 = inlined_call_operand.vmem [shape: f32[8,128], index: 5, kind: input, shape index: {}]
  %s6 = inlined_call_operand.vmem [shape: f32[16,1], index: 6, kind: output, shape index: {}]
  %s7 = sld [smem:[#allocation0]]
  $region69: #{tpu_custom_call.1} parent=0
    _
  %s9 = ssub.s32 1, %s7
  %s10 = scalar_select 0, %s9, %s7
  %11 = sst [smem:[#allocation6]] %s0
  loop: start=0, step=1, limit=10
  $region2: #{tpu_custom_call.1} parent=0 // loop_pre_header
    _
  $region3: #{tpu_custom_call.1} parent=0 // loop_header
    %s13 = sphi 0, %s17
    %p14 = scmp.ge.s32.totalorder %s13, 10
    %s20 = sphi 0, %s32
    %s21 = sphi 0, %s28
    %s22 = sphi 0, %s20
    %s23 = sphi 0, %s21
    %s24 = sphi 0, %s22
    %s25 = sphi 0, %s23
    %s35 = sphi 0, %s37
    %s38 = sphi 0, %s35
    %s39 = sphi 0, %s38
    %s55 = sphi 0, %s39
    %s59 = sphi 0, %s59
    %s61 = sphi 0, %s59
    %s62 = sphi 0, %s61
    %s76 = sphi 0, %s62
    %s80 = sphi 0, %s80
    %s82 = sphi 0, %s80
    %s83 = sphi 0, %s82
    %s97 = sphi 0, %s83
    %s101 = sphi 0, %s101
    %s103 = sphi 0, %s101
    %s104 = sphi 0, %s103
    %s118 = sphi 0, %s104
    %s122 = sphi 0, %s122
    %s124 = sphi 0, %s122
    %s125 = sphi 0, %s124
    %s139 = sphi 0, %s125
    %s145 = sphi 0, %s147
    %s148 = sphi 0, %s145
    %s149 = sphi 0, %s148
    %s165 = sphi 0, %s149
  $region4: #{tpu_custom_call.1} parent=0 // loop_header_branch
    %16 = sbr.rel (%p14) target = $region8
  $region5: #{tpu_custom_call.1} parent=0 // loop_body
    %s18 = ssub.s32 %s13, 1
    %s19 = ssub.s32 %s13, 2
    %s26 = sadd.s32 1, %s21
    %p27 = scmp.ge.s32.totalorder %s26, 2
    %s28 = scalar_select %p27, 0, %s26
    %s29 = sadd.s32 1, %s20
    %s30 = scalar_select %p27, %s29, %s20
    %p31 = scmp.ge.s32.totalorder %s30, 4
    %s32 = scalar_select %p31, 0, %s30
    %s33 = ssub.s32 %s21, %s28
    %p34 = scmp.eq.s32.totalorder %s33, 0
    %s36 = sadd.s32 %s35, 1
    %s37 = scalar_select %p34, %s35, %s36
    %p40 = pneg %p34
    %p41 = scmp.eq.s32.totalorder %s13, 7
    %p42 = por %p40, %p41
    %p43 = scmp.ne.s32.totalorder %s35, %s38
    %p44 = scmp.eq.s32.totalorder %s13, 0
    %p45 = por %p43, %p44
    %p46 = scmp.ne.s32.totalorder %s35, %s38
    %p47 = scmp.eq.s32.totalorder %s18, 7
    %p48 = por %p46, %p47
    %p49 = scmp.ne.s32.totalorder %s38, %s39
    %p50 = scmp.eq.s32.totalorder %s18, 0
    %p51 = por %p49, %p50
    %p52 = scmp.ne.s32.totalorder %s38, %s39
    %p53 = scmp.eq.s32.totalorder %s19, 7
    %p54 = por %p52, %p53
    %p56 = scmp.ne.s32.totalorder %s39, %s55
    %p57 = scmp.eq.s32.totalorder %s19, 0
    %p58 = por %p56, %p57
    %s60 = sadd.s32 %s59, 1
    %p63 = scmp.eq.s32.totalorder %s13, 7
    %p64 = scmp.ne.s32.totalorder %s59, %s61
    %p65 = scmp.eq.s32.totalorder %s13, 0
    %p66 = por %p64, %p65
    %p67 = scmp.ne.s32.totalorder %s59, %s61
    %p68 = scmp.eq.s32.totalorder %s18, 7
    %p69 = por %p67, %p68
    %p70 = scmp.ne.s32.totalorder %s61, %s62
    %p71 = scmp.eq.s32.totalorder %s18, 0
    %p72 = por %p70, %p71
    %p73 = scmp.ne.s32.totalorder %s61, %s62
    %p74 = scmp.eq.s32.totalorder %s19, 7
    %p75 = por %p73, %p74
    %p77 = scmp.ne.s32.totalorder %s62, %s76
    %p78 = scmp.eq.s32.totalorder %s19, 0
    %p79 = por %p77, %p78
    %s81 = sadd.s32 %s80, 1
    %p84 = scmp.eq.s32.totalorder %s13, 7
    %p85 = scmp.ne.s32.totalorder %s80, %s82
    %p86 = scmp.eq.s32.totalorder %s13, 0
    %p87 = por %p85, %p86
    %p88 = scmp.ne.s32.totalorder %s80, %s82
    %p89 = scmp.eq.s32.totalorder %s18, 7
    %p90 = por %p88, %p89
    %p91 = scmp.ne.s32.totalorder %s82, %s83
    %p92 = scmp.eq.s32.totalorder %s18, 0
    %p93 = por %p91, %p92
    %p94 = scmp.ne.s32.totalorder %s82, %s83
    %p95 = scmp.eq.s32.totalorder %s19, 7
    %p96 = por %p94, %p95
    %p98 = scmp.ne.s32.totalorder %s83, %s97
    %p99 = scmp.eq.s32.totalorder %s19, 0
    %p100 = por %p98, %p99
    %s102 = sadd.s32 %s101, 1
    %p105 = scmp.eq.s32.totalorder %s13, 7
    %p106 = scmp.ne.s32.totalorder %s101, %s103
    %p107 = scmp.eq.s32.totalorder %s13, 0
    %p108 = por %p106, %p107
    %p109 = scmp.ne.s32.totalorder %s101, %s103
    %p110 = scmp.eq.s32.totalorder %s18, 7
    %p111 = por %p109, %p110
    %p112 = scmp.ne.s32.totalorder %s103, %s104
    %p113 = scmp.eq.s32.totalorder %s18, 0
    %p114 = por %p112, %p113
    %p115 = scmp.ne.s32.totalorder %s103, %s104
    %p116 = scmp.eq.s32.totalorder %s19, 7
    %p117 = por %p115, %p116
    %p119 = scmp.ne.s32.totalorder %s104, %s118
    %p120 = scmp.eq.s32.totalorder %s19, 0
    %p121 = por %p119, %p120
    %s123 = sadd.s32 %s122, 1
    %p126 = scmp.eq.s32.totalorder %s13, 7
    %p127 = scmp.ne.s32.totalorder %s122, %s124
    %p128 = scmp.eq.s32.totalorder %s13, 0
    %p129 = por %p127, %p128
    %p130 = scmp.ne.s32.totalorder %s122, %s124
    %p131 = scmp.eq.s32.totalorder %s18, 7
    %p132 = por %p130, %p131
    %p133 = scmp.ne.s32.totalorder %s124, %s125
    %p134 = scmp.eq.s32.totalorder %s18, 0
    %p135 = por %p133, %p134
    %p136 = scmp.ne.s32.totalorder %s124, %s125
    %p137 = scmp.eq.s32.totalorder %s19, 7
    %p138 = por %p136, %p137
    %p140 = scmp.ne.s32.totalorder %s125, %s139
    %p141 = scmp.eq.s32.totalorder %s19, 0
    %p142 = por %p140, %p141
    %s143 = ssub.s32 %s21, %s28
    %p144 = scmp.eq.s32.totalorder %s143, 0
    %s146 = sadd.s32 %s145, 1
    %s147 = scalar_select %p144, %s145, %s146
    %p150 = pneg %p144
    %p151 = scmp.eq.s32.totalorder %s13, 7
    %p152 = por %p150, %p151
    %p153 = scmp.ne.s32.totalorder %s145, %s148
    %p154 = scmp.eq.s32.totalorder %s13, 0
    %p155 = por %p153, %p154
    %p156 = scmp.ne.s32.totalorder %s145, %s148
    %p157 = scmp.eq.s32.totalorder %s18, 7
    %p158 = por %p156, %p157
    %p159 = scmp.ne.s32.totalorder %s148, %s149
    %p160 = scmp.eq.s32.totalorder %s18, 0
    %p161 = por %p159, %p160
    %p162 = scmp.ne.s32.totalorder %s148, %s149
    %p163 = scmp.eq.s32.totalorder %s19, 7
    %p164 = por %p162, %p163
    %p166 = scmp.ne.s32.totalorder %s149, %s165
    %p167 = scmp.eq.s32.totalorder %s19, 0
    %p168 = por %p166, %p167
    %p169 = scmp.le.s32.totalorder 1, %s13
    %p170 = scmp.lt.s32.totalorder %s13, 9
    %p171 = pnand %p169, %p170
    %p172 = pneg %p171
    // Predicated region
    $region9: #{tpu_custom_call.1} parent=5 // pred_check
      _
    $region10: #{tpu_custom_call.1} parent=5 // pred_check_branch
      %174 = sbr.rel (%p171) target = $region12
    $region11: #{tpu_custom_call.1} parent=5 // pred_region
      %s175 = ssub.s32 %s13, 1
      // Predicated region
      $region13: #{tpu_custom_call.1} parent=11 // pred_check
        %p176 = pneg %p72
      $region14: #{tpu_custom_call.1} parent=11 // pred_check_branch
        %178 = sbr.rel (%p176) target = $region16
      $region15: #{tpu_custom_call.1} parent=11 // pred_region
        _
      $region16: #{tpu_custom_call.1} parent=11 // pred_fallthru
        _
      // Predicated region
      $region17: #{tpu_custom_call.1} parent=11 // pred_check
        %p179 = pneg %p93
      $region18: #{tpu_custom_call.1} parent=11 // pred_check_branch
        %181 = sbr.rel (%p179) target = $region20
      $region19: #{tpu_custom_call.1} parent=11 // pred_region
        _
      $region20: #{tpu_custom_call.1} parent=11 // pred_fallthru
        _
      // Predicated region
      $region21: #{tpu_custom_call.1} parent=11 // pred_check
        %p182 = pneg %p114
      $region22: #{tpu_custom_call.1} parent=11 // pred_check_branch
        %184 = sbr.rel (%p182) target = $region24
      $region23: #{tpu_custom_call.1} parent=11 // pred_region
        _
      $region24: #{tpu_custom_call.1} parent=11 // pred_fallthru
        _
      // Predicated region
      $region25: #{tpu_custom_call.1} parent=11 // pred_check
        %p185 = pneg %p135
      $region26: #{tpu_custom_call.1} parent=11 // pred_check_branch
        %187 = sbr.rel (%p185) target = $region28
      $region27: #{tpu_custom_call.1} parent=11 // pred_region
        _
      $region28: #{tpu_custom_call.1} parent=11 // pred_fallthru
        _
    $region12: #{tpu_custom_call.1} parent=5 // pred_fallthru
      _
    %p188 = scmp.lt.s32.totalorder %s13, 8
    // Predicated region
    $region29: #{tpu_custom_call.1} parent=5 // pred_check
      %p189 = pneg %p188
    $region30: #{tpu_custom_call.1} parent=5 // pred_check_branch
      %191 = sbr.rel (%p189) target = $region32
    $region31: #{tpu_custom_call.1} parent=5 // pred_region
      // Predicated region
      $region33: #{tpu_custom_call.1} parent=31 // pred_check
        %p192 = pneg %p45
      $region34: #{tpu_custom_call.1} parent=31 // pred_check_branch
        %194 = sbr.rel (%p192) target = $region36
      $region35: #{tpu_custom_call.1} parent=31 // pred_region
        %p195 = scmp.lt.s32.totalorder %s21, 1
        %s196 = scalar_select %p195, %s21, 1
        %s197 = smul.addr %s196, 8
        %s198 = scalar_lea.vmem %s1, %s197
      $region36: #{tpu_custom_call.1} parent=31 // pred_fallthru
        _
    $region32: #{tpu_custom_call.1} parent=5 // pred_fallthru
      _
    %p199 = scmp.le.s32.totalorder 1, %s13
    %p200 = scmp.lt.s32.totalorder %s13, 9
    %p201 = pnand %p199, %p200
    %p202 = pneg %p201
    // Predicated region
    $region37: #{tpu_custom_call.1} parent=5 // pred_check
      _
    $region38: #{tpu_custom_call.1} parent=5 // pred_check_branch
      %204 = sbr.rel (%p201) target = $region40
    $region39: #{tpu_custom_call.1} parent=5 // pred_region
      %s205 = ssub.s32 %s13, 1
      %p206 = scmp.lt.s32.totalorder %s23, 1
      %s207 = scalar_select %p206, %s23, 1
      %s208 = smul.addr %s207, 8
      %s209 = scalar_lea.vmem %s1, %s208
      %p210 = pneg %p51
      %p211 = pneg %p48
      %p212 = pneg %p72
      %p213 = pneg %p69
      %p214 = pneg %p93
      %p215 = pneg %p90
      %p216 = pneg %p114
      %p217 = pneg %p111
      %p218 = pneg %p135
      %p219 = pneg %p132
      %p220 = pneg %p161
      %p221 = pneg %p158
      %p222 = scmp.lt.s32.totalorder %s23, 1
      %s223 = scalar_select %p222, %s23, 1
      %s224 = smul.addr %s223, 8
      %s225 = scalar_lea.vmem %s6, %s224
      %p226 = scmp.lt.s32.totalorder %s23, 1
      %s227 = scalar_select %p226, %s23, 1
      %s228 = smul.addr %s227, 8
      %s229 = scalar_lea.vmem %s1, %s228
      %p230 = scmp.lt.s32.totalorder %s23, 1
      %s231 = scalar_select %p230, %s23, 1
      %s232 = smul.addr %s231, 8
      %s233 = scalar_lea.vmem %s6, %s232
      %p234 = scmp.eq.s32.totalorder %s22, 0
      %p235 = scmp.eq.s32.totalorder %s23, 0
      %p236 = pnand %p234, %p235
      %p237 = pneg %p236
      // Predicated region
      $region41: #{tpu_custom_call.1} parent=39 // pred_check
        _
      $region42: #{tpu_custom_call.1} parent=39 // pred_check_branch
        %239 = sbr.rel (%p236) target = $region44
      $region43: #{tpu_custom_call.1} parent=39 // pred_region
        %240 = vst [vmem:[#allocation2] sm:$0x3] 0.0
        %vm241 = vcmask 517120
        %242 = vst.msk [vmem:[#allocation3] sm:$0x3] %vm241, 0.0
        %vm243 = vcmask 123904
        %244 = vst.msk [vmem:[#allocation4] sm:$0x3] %vm243, 0.0
      $region44: #{tpu_custom_call.1} parent=39 // pred_fallthru
        _
      %s245 = sld [smem:[#allocation6]]
      %s246 = scvt.s32.f32 %s245
      %v247 = vstv %s246
      %v248 = vrcp.pop %v247
      %s249 = vtos %v248
      %v250 = vld [vmem:[%s5] sm:$0x1]
      %v251 = vld [vmem:[%s5 + $0x1] sm:$0x1]
      %v252 = vld [vmem:[%s5 + $0x2] sm:$0x1]
      %v253 = vld [vmem:[%s5 + $0x3] sm:$0x1]
      %v254 = vld [vmem:[%s5 + $0x4] sm:$0x1]
      %v255 = vld [vmem:[%s5 + $0x5] sm:$0x1]
      %v256 = vld [vmem:[%s5 + $0x6] sm:$0x1]
      %v257 = vld [vmem:[%s5 + $0x7] sm:$0x1]
      %v258 = vlaneseq
      %v259 = vshrl.u32 %v258, 7
      %s260 = smul.u32 %s23, 8
      %v261 = vstv %s260
      %v262 = vadd.s32 %v259, %v261
      %v263 = vstv %s245
      %vm264 = vcmp.lt.s32.totalorder %v262, %v263
      %v265 = vsel %vm264, 1, 0
      %v266 = vcvt.s32.f32 %v265
      %v267 = vld [vmem:[%s229] sm:$0xff]
      %v268 = vld [vmem:[%s2] sm:$0xff]
      %v269 = vld [vmem:[%s2 + $0x8] sm:$0xff]
      %v270 = vld [vmem:[%s2 + $0x10] sm:$0xff]
      %v271 = vld [vmem:[%s2 + $0x18] sm:$0xff]
      %vm272 = vcmask 261120
      %v274 = vsel %vm272, %v267, 0
      %276 = vmatprep.subr.mxu0 0.0
      %277 = vmatpush1.msra.mxu0 %v268
      %278 = vmatprep.subr.mxu0 0.0
      %279 = vmatpush1.msra.mxu0 %v269
      %280 = vmatprep.subr.mxu0 0.0
      %281 = vmatpush1.msra.mxu0 %v270
      %282 = vmatprep.subr.mxu0 0.0
      %283 = vmatpush1.msra.mxu0 %v271
      %284 = vmatprep.subr.mxu0 0.0
      %285 = vmatpush1.msra.mxu0 0.0
      %286 = vmatprep.subr.mxu0 0.0
      %287 = vmatpush1.msra.mxu0 0.0
      %288 = vmatprep.subr.mxu0 0.0
      %289 = vmatpush1.msra.mxu0 0.0
      %290 = vmatprep.subr.mxu0 0.0
      %291 = vmatpush1.msra.mxu0 0.0
      %292 = vmatprep.subr.mxu0 0.0
      %293 = vmatpush1.msra.mxu0 0.0
      %294 = vmatprep.subr.mxu0 0.0
      %295 = vmatpush1.msra.mxu0 0.0
      %296 = vmatprep.subr.mxu0 0.0
      %297 = vmatpush1.msra.mxu0 0.0
      %298 = vmatprep.subr.mxu0 0.0
      %299 = vmatpush1.msra.mxu0 0.0
      %300 = vmatprep.subr.mxu0 0.0
      %301 = vmatpush1.msra.mxu0 0.0
      %302 = vmatprep.subr.mxu0 0.0
      %303 = vmatpush1.msra.mxu0 0.0
      %304 = vmatprep.subr.mxu0 0.0
      %305 = vmatpush1.msra.mxu0 0.0
      %306 = vmatprep.subr.mxu0 0.0
      %307 = vmatpush1.msra.mxu0 0.0
      %308 = vmatprep.subr.mxu0 0.0
      %309 = vmatpush1.msra.mxu0 0.0
      %310 = vmatprep.subr.mxu0 0.0
      %311 = vmatpush1.msra.mxu0 0.0
      %312 = vmatprep.subr.mxu0 0.0
      %313 = vmatpush1.msra.mxu0 0.0
      %314 = vmatprep.subr.mxu0 0.0
      %315 = vmatpush1.msra.mxu0 0.0
      %316 = vmatprep.subr.mxu0 0.0
      %317 = vmatpush1.msra.mxu0 0.0
      %318 = vmatprep.subr.mxu0 0.0
      %319 = vmatpush1.msra.mxu0 0.0
      %320 = vmatprep.subr.mxu0 0.0
      %321 = vmatpush1.msra.mxu0 0.0
      %322 = vmatprep.subr.mxu0 0.0
      %323 = vmatpush1.msra.mxu0 0.0
      %324 = vmatprep.subr.mxu0 0.0
      %325 = vmatpush1.msra.mxu0 0.0
      %326 = vmatprep.subr.mxu0 0.0
      %327 = vmatpush1.msra.mxu0 0.0
      %328 = vmatprep.subr.mxu0 0.0
      %329 = vmatpush1.msra.mxu0 0.0
      %330 = vmatprep.subr.mxu0 0.0
      %331 = vmatpush1.msra.mxu0 0.0
      %332 = vmatprep.subr.mxu0 0.0
      %333 = vmatpush1.msra.mxu0 0.0
      %334 = vmatprep.subr.mxu0 0.0
      %335 = vmatpush1.msra.mxu0 0.0
      %336 = vmatprep.subr.mxu0 0.0
      %337 = vmatpush1.msra.mxu0 0.0
      %338 = vmatprep.subr.mxu0 0.0
      %339 = vmatpush1.msra.mxu0 0.0
      %340 = vmatprep.mubr.f32.mxu0 0.0
      %341 = vmatmul.mubr.f32.gmra.mrb[0].mxu0 %v274
      %v342 = vpop.f32.mrb[0].mxu0
      %v343 = vadd.f32 0.0, %v342
      %v344 = vpop.f32.mrb[0].mxu0
      %345 = vdwg.mxu0
      // Predicated region
      $region45: #{tpu_custom_call.1} parent=39 // pred_check
        %p346 = pneg %p234
      $region46: #{tpu_custom_call.1} parent=39 // pred_check_branch
        %348 = sbr.rel (%p346) target = $region48
      $region47: #{tpu_custom_call.1} parent=39 // pred_region
        %v349 = vld [vmem:[#allocation2] sm:$0x1]
        %v350 = vmul.f32 %v343, %v266
        %v351 = vrot.slane %v350, 4
        %v352 = vadd.f32 %v350, %v351
        %v353 = vrot.slane %v352, 2
        %v354 = vadd.f32 %v352, %v353
        %v355 = vrot.slane %v354, 1
        %v356 = vadd.f32 %v354, %v355
        %v357 = vadd.f32 %v349, %v356
        %358 = vst [vmem:[#allocation2] sm:$0x1] %v357
        %v359 = vld [vmem:[#allocation2 + $0x1] sm:$0x1]
        %v360 = vmul.f32 %v343, %v343
        %v361 = vmul.f32 %v360, %v266
        %v362 = vrot.slane %v361, 4
        %v363 = vadd.f32 %v361, %v362
        %v364 = vrot.slane %v363, 2
        %v365 = vadd.f32 %v363, %v364
        %v366 = vrot.slane %v365, 1
        %v367 = vadd.f32 %v365, %v366
        %v368 = vadd.f32 %v359, %v367
        %369 = vst [vmem:[#allocation2 + $0x1] sm:$0x1] %v368
      $region48: #{tpu_custom_call.1} parent=39 // pred_fallthru
        _
      %v370 = vld [vmem:[#allocation2] sm:$0x1]
      %v371 = vld [vmem:[#allocation2 + $0x1] sm:$0x1]
      %v372 = vstv %s249
      %v373 = vmul.f32 %v370, %v372
      %v374 = vmul.f32 %v371, %v372
      %v375 = vmul.f32 %v373, %v373
      %v376 = vsub.f32 %v374, %v375
      %v377 = vlaneseq
      %v378 = vshrl.u32 %v377, 7
      %v379 = vsub.s32 0, %v378
      %v380 = vrot.slane %v373, %v379
      %v381 = vsub.f32 %v343, %v380
      %v382 = vadd.f32 %v376, 1e-05
      %v383 = vrsqrt.pop %v382
      %v384 = vlaneseq
      %v385 = vshrl.u32 %v384, 7
      %v386 = vsub.s32 0, %v385
      %v387 = vrot.slane %v383, %v386
      %v388 = vmul.f32 %v381, %v387
      %v389 = vlaneseq
      %v390 = vshrl.u32 %v389, 7
      %v391 = vsub.s32 0, %v390
      %v392 = vrot.slane %v250, %v391
      %v393 = vmul.f32 %v388, %v392
      %v394 = vlaneseq
      %v395 = vshrl.u32 %v394, 7
      %v396 = vsub.s32 0, %v395
      %v397 = vrot.slane %v251, %v396
      %v398 = vadd.f32 %v393, %v397
      %v399 = vmul.f32 %v398, 0.5
      %v400 = vtanh.pop %v399
      %v401 = vadd.f32 %v400, 1.0
      %v402 = vmul.f32 %v401, 0.5
      %v403 = vld [vmem:[%s3] sm:$0xff]
      %v404 = vld [vmem:[%s3 + $0x8] sm:$0xff]
      %v405 = vld [vmem:[%s3 + $0x10] sm:$0xff]
      %v406 = vld [vmem:[%s3 + $0x18] sm:$0xff]
      %v407 = vld [vmem:[%s3 + $0x20] sm:$0xff]
      %v408 = vld [vmem:[%s3 + $0x28] sm:$0xff]
      %v409 = vld [vmem:[%s3 + $0x30] sm:$0xff]
      %v410 = vld [vmem:[%s3 + $0x38] sm:$0xff]
      %v411 = vld [vmem:[%s3 + $0x40] sm:$0xff]
      %v412 = vld [vmem:[%s3 + $0x48] sm:$0xff]
      %v413 = vld [vmem:[%s3 + $0x50] sm:$0xff]
      %v414 = vld [vmem:[%s3 + $0x58] sm:$0xff]
      %v415 = vld [vmem:[%s3 + $0x60] sm:$0xff]
      %v416 = vld [vmem:[%s3 + $0x68] sm:$0xff]
      %v417 = vld [vmem:[%s3 + $0x70] sm:$0xff]
      %v418 = vld [vmem:[%s3 + $0x78] sm:$0xff]
      %419 = vmatprep.subr.mxu0 0.0
      %420 = vmatpush1.msra.mxu0 %v403
      %421 = vmatprep.subr.mxu0 0.0
      %422 = vmatpush1.msra.mxu0 %v404
      %423 = vmatprep.subr.mxu0 0.0
      %424 = vmatpush1.msra.mxu0 %v405
      %425 = vmatprep.subr.mxu0 0.0
      %426 = vmatpush1.msra.mxu0 %v406
      %427 = vmatprep.subr.mxu0 0.0
      %428 = vmatpush1.msra.mxu0 %v407
      %429 = vmatprep.subr.mxu0 0.0
      %430 = vmatpush1.msra.mxu0 %v408
      %431 = vmatprep.subr.mxu0 0.0
      %432 = vmatpush1.msra.mxu0 %v409
      %433 = vmatprep.subr.mxu0 0.0
      %434 = vmatpush1.msra.mxu0 %v410
      %435 = vmatprep.subr.mxu0 0.0
      %436 = vmatpush1.msra.mxu0 %v411
      %437 = vmatprep.subr.mxu0 0.0
      %438 = vmatpush1.msra.mxu0 %v412
      %439 = vmatprep.subr.mxu0 0.0
      %440 = vmatpush1.msra.mxu0 %v413
      %441 = vmatprep.subr.mxu0 0.0
      %442 = vmatpush1.msra.mxu0 %v414
      %443 = vmatprep.subr.mxu0 0.0
      %444 = vmatpush1.msra.mxu0 %v415
      %445 = vmatprep.subr.mxu0 0.0
      %446 = vmatpush1.msra.mxu0 %v416
      %447 = vmatprep.subr.mxu0 0.0
      %448 = vmatpush1.msra.mxu0 %v417
      %449 = vmatprep.subr.mxu0 0.0
      %450 = vmatpush1.msra.mxu0 %v418
      %451 = vmatprep.subr.mxu0 0.0
      %452 = vmatpush1.msra.mxu0 0.0
      %453 = vmatprep.subr.mxu0 0.0
      %454 = vmatpush1.msra.mxu0 0.0
      %455 = vmatprep.subr.mxu0 0.0
      %456 = vmatpush1.msra.mxu0 0.0
      %457 = vmatprep.subr.mxu0 0.0
      %458 = vmatpush1.msra.mxu0 0.0
      %459 = vmatprep.subr.mxu0 0.0
      %460 = vmatpush1.msra.mxu0 0.0
      %461 = vmatprep.subr.mxu0 0.0
      %462 = vmatpush1.msra.mxu0 0.0
      %463 = vmatprep.subr.mxu0 0.0
      %464 = vmatpush1.msra.mxu0 0.0
      %465 = vmatprep.subr.mxu0 0.0
      %466 = vmatpush1.msra.mxu0 0.0
      %467 = vmatprep.subr.mxu0 0.0
      %468 = vmatpush1.msra.mxu0 0.0
      %469 = vmatprep.subr.mxu0 0.0
      %470 = vmatpush1.msra.mxu0 0.0
      %471 = vmatprep.subr.mxu0 0.0
      %472 = vmatpush1.msra.mxu0 0.0
      %473 = vmatprep.subr.mxu0 0.0
      %474 = vmatpush1.msra.mxu0 0.0
      %475 = vmatprep.subr.mxu0 0.0
      %476 = vmatpush1.msra.mxu0 0.0
      %477 = vmatprep.subr.mxu0 0.0
      %478 = vmatpush1.msra.mxu0 0.0
      %479 = vmatprep.subr.mxu0 0.0
      %480 = vmatpush1.msra.mxu0 0.0
      %481 = vmatprep.subr.mxu0 0.0
      %482 = vmatpush1.msra.mxu0 0.0
      %483 = vmatprep.mubr.f32.mxu0 0.0
      %484 = vmatmul.mubr.f32.gmra.mrb[0].mxu0 %v402
      %v485 = vpop.f32.mrb[0].mxu0
      %v486 = vadd.f32 0.0, %v485
      %v487 = vpop.f32.mrb[0].mxu0
      %488 = vdwg.mxu0
      %p489 = scmp.eq.s32.totalorder %s22, 1
      // Predicated region
      $region49: #{tpu_custom_call.1} parent=39 // pred_check
        %p490 = pneg %p489
      $region50: #{tpu_custom_call.1} parent=39 // pred_check_branch
        %492 = sbr.rel (%p490) target = $region52
      $region51: #{tpu_custom_call.1} parent=39 // pred_region
        %v493 = vld [vmem:[#allocation3] sm:$0x1]
        %v494 = vmul.f32 %v486, %v266
        %vm495 = vcmask 523264
        %v496 = vsel %vm495, %v494, 0.0
        %v497 = vrot.slane %v496, 4
        %v498 = vadd.f32 %v496, %v497
        %v499 = vrot.slane %v498, 2
        %v500 = vadd.f32 %v498, %v499
        %v501 = vrot.slane %v500, 1
        %v502 = vadd.f32 %v500, %v501
        %v503 = vadd.f32 %v493, %v502
        %vm504 = vcmask 516096
        %505 = vst.msk [vmem:[#allocation3] sm:$0x1] %vm504, %v503
        %v506 = vld [vmem:[#allocation3 + $0x1] sm:$0x1]
        %v507 = vmul.f32 %v486, %v486
        %v508 = vmul.f32 %v507, %v266
        %v509 = vsel %vm495, %v508, 0.0
        %v510 = vrot.slane %v509, 4
        %v511 = vadd.f32 %v509, %v510
        %v512 = vrot.slane %v511, 2
        %v513 = vadd.f32 %v511, %v512
        %v514 = vrot.slane %v513, 1
        %v515 = vadd.f32 %v513, %v514
        %v516 = vadd.f32 %v506, %v515
        %517 = vst.msk [vmem:[#allocation3 + $0x1] sm:$0x1] %vm504, %v516
      $region52: #{tpu_custom_call.1} parent=39 // pred_fallthru
        _
      %v518 = vld [vmem:[#allocation3] sm:$0x1]
      %v519 = vld [vmem:[#allocation3 + $0x1] sm:$0x1]
      %v520 = vmul.f32 %v518, %v372
      %v521 = vmul.f32 %v519, %v372
      %v522 = vmul.f32 %v520, %v520
      %v523 = vsub.f32 %v521, %v522
      %v524 = vlaneseq
      %v525 = vshrl.u32 %v524, 7
      %v526 = vsub.s32 0, %v525
      %v527 = vrot.slane %v520, %v526
      %v528 = vsub.f32 %v486, %v527
      %v529 = vadd.f32 %v523, 1e-05
      %v530 = vrsqrt.pop %v529
      %v531 = vlaneseq
      %v532 = vshrl.u32 %v531, 7
      %v533 = vsub.s32 0, %v532
      %v534 = vrot.slane %v530, %v533
      %v535 = vmul.f32 %v528, %v534
      %v536 = vlaneseq
      %v537 = vshrl.u32 %v536, 7
      %v538 = vsub.s32 0, %v537
      %v539 = vrot.slane %v252, %v538
      %v540 = vmul.f32 %v535, %v539
      %v541 = vlaneseq
      %v542 = vshrl.u32 %v541, 7
      %v543 = vsub.s32 0, %v542
      %v544 = vrot.slane %v253, %v543
      %v545 = vadd.f32 %v540, %v544
      %v546 = vmul.f32 %v545, 0.5
      %v547 = vtanh.pop %v546
      %v548 = vadd.f32 %v547, 1.0
      %v549 = vmul.f32 %v548, 0.5
      %v550 = vld [vmem:[%s4] sm:$0xff]
      %v551 = vld [vmem:[%s4 + $0x8] sm:$0xff]
      %v552 = vld [vmem:[%s4 + $0x10] sm:$0xff]
      %v553 = vld [vmem:[%s4 + $0x18] sm:$0xff]
      %v554 = vld [vmem:[%s4 + $0x20] sm:$0xff]
      %v555 = vld [vmem:[%s4 + $0x28] sm:$0xff]
      %v556 = vld [vmem:[%s4 + $0x30] sm:$0xff]
      %v557 = vld [vmem:[%s4 + $0x38] sm:$0xff]
      %vm558 = vcmask 523264
      %v560 = vsel %vm558, %v549, 0
      %562 = vmatprep.subr.mxu0 0.0
      %563 = vmatpush1.msra.mxu0 %v550
      %564 = vmatprep.subr.mxu0 0.0
      %565 = vmatpush1.msra.mxu0 %v551
      %566 = vmatprep.subr.mxu0 0.0
      %567 = vmatpush1.msra.mxu0 %v552
      %568 = vmatprep.subr.mxu0 0.0
      %569 = vmatpush1.msra.mxu0 %v553
      %570 = vmatprep.subr.mxu0 0.0
      %571 = vmatpush1.msra.mxu0 %v554
      %572 = vmatprep.subr.mxu0 0.0
      %573 = vmatpush1.msra.mxu0 %v555
      %574 = vmatprep.subr.mxu0 0.0
      %575 = vmatpush1.msra.mxu0 %v556
      %576 = vmatprep.subr.mxu0 0.0
      %577 = vmatpush1.msra.mxu0 %v557
      %578 = vmatprep.subr.mxu0 0.0
      %579 = vmatpush1.msra.mxu0 0.0
      %580 = vmatprep.subr.mxu0 0.0
      %581 = vmatpush1.msra.mxu0 0.0
      %582 = vmatprep.subr.mxu0 0.0
      %583 = vmatpush1.msra.mxu0 0.0
      %584 = vmatprep.subr.mxu0 0.0
      %585 = vmatpush1.msra.mxu0 0.0
      %586 = vmatprep.subr.mxu0 0.0
      %587 = vmatpush1.msra.mxu0 0.0
      %588 = vmatprep.subr.mxu0 0.0
      %589 = vmatpush1.msra.mxu0 0.0
      %590 = vmatprep.subr.mxu0 0.0
      %591 = vmatpush1.msra.mxu0 0.0
      %592 = vmatprep.subr.mxu0 0.0
      %593 = vmatpush1.msra.mxu0 0.0
      %594 = vmatprep.subr.mxu0 0.0
      %595 = vmatpush1.msra.mxu0 0.0
      %596 = vmatprep.subr.mxu0 0.0
      %597 = vmatpush1.msra.mxu0 0.0
      %598 = vmatprep.subr.mxu0 0.0
      %599 = vmatpush1.msra.mxu0 0.0
      %600 = vmatprep.subr.mxu0 0.0
      %601 = vmatpush1.msra.mxu0 0.0
      %602 = vmatprep.subr.mxu0 0.0
      %603 = vmatpush1.msra.mxu0 0.0
      %604 = vmatprep.subr.mxu0 0.0
      %605 = vmatpush1.msra.mxu0 0.0
      %606 = vmatprep.subr.mxu0 0.0
      %607 = vmatpush1.msra.mxu0 0.0
      %608 = vmatprep.subr.mxu0 0.0
      %609 = vmatpush1.msra.mxu0 0.0
      %610 = vmatprep.subr.mxu0 0.0
      %611 = vmatpush1.msra.mxu0 0.0
      %612 = vmatprep.subr.mxu0 0.0
      %613 = vmatpush1.msra.mxu0 0.0
      %614 = vmatprep.subr.mxu0 0.0
      %615 = vmatpush1.msra.mxu0 0.0
      %616 = vmatprep.subr.mxu0 0.0
      %617 = vmatpush1.msra.mxu0 0.0
      %618 = vmatprep.subr.mxu0 0.0
      %619 = vmatpush1.msra.mxu0 0.0
      %620 = vmatprep.subr.mxu0 0.0
      %621 = vmatpush1.msra.mxu0 0.0
      %622 = vmatprep.subr.mxu0 0.0
      %623 = vmatpush1.msra.mxu0 0.0
      %624 = vmatprep.subr.mxu0 0.0
      %625 = vmatpush1.msra.mxu0 0.0
      %626 = vmatprep.mubr.f32.mxu0 0.0
      %627 = vmatmul.mubr.f32.gmra.mrb[0].mxu0 %v560
      %v628 = vpop.f32.mrb[0].mxu0
      %v629 = vadd.f32 0.0, %v628
      %v630 = vpop.f32.mrb[0].mxu0
      %631 = vdwg.mxu0
      %p632 = scmp.eq.s32.totalorder %s22, 2
      // Predicated region
      $region53: #{tpu_custom_call.1} parent=39 // pred_check
        %p633 = pneg %p632
      $region54: #{tpu_custom_call.1} parent=39 // pred_check_branch
        %635 = sbr.rel (%p633) target = $region56
      $region55: #{tpu_custom_call.1} parent=39 // pred_region
        %v636 = vld [vmem:[#allocation4] sm:$0x1]
        %v637 = vmul.f32 %v629, %v266
        %vm638 = vcmask 130048
        %v639 = vsel %vm638, %v637, 0.0
        %v640 = vrot.slane %v639, 4
        %v641 = vadd.f32 %v639, %v640
        %v642 = vrot.slane %v641, 2
        %v643 = vadd.f32 %v641, %v642
        %v644 = vrot.slane %v643, 1
        %v645 = vadd.f32 %v643, %v644
        %v646 = vadd.f32 %v636, %v645
        %vm647 = vcmask 122880
        %648 = vst.msk [vmem:[#allocation4] sm:$0x1] %vm647, %v646
        %v649 = vld [vmem:[#allocation4 + $0x1] sm:$0x1]
        %v650 = vmul.f32 %v629, %v629
        %v651 = vmul.f32 %v650, %v266
        %v652 = vsel %vm638, %v651, 0.0
        %v653 = vrot.slane %v652, 4
        %v654 = vadd.f32 %v652, %v653
        %v655 = vrot.slane %v654, 2
        %v656 = vadd.f32 %v654, %v655
        %v657 = vrot.slane %v656, 1
        %v658 = vadd.f32 %v656, %v657
        %v659 = vadd.f32 %v649, %v658
        %660 = vst.msk [vmem:[#allocation4 + $0x1] sm:$0x1] %vm647, %v659
      $region56: #{tpu_custom_call.1} parent=39 // pred_fallthru
        _
      %v661 = vld [vmem:[#allocation4] sm:$0x1]
      %v662 = vld [vmem:[#allocation4 + $0x1] sm:$0x1]
      %v663 = vmul.f32 %v661, %v372
      %v664 = vmul.f32 %v662, %v372
      %v665 = vmul.f32 %v663, %v663
      %v666 = vsub.f32 %v664, %v665
      %v667 = vlaneseq
      %v668 = vshrl.u32 %v667, 7
      %v669 = vsub.s32 0, %v668
      %v670 = vrot.slane %v663, %v669
      %v671 = vsub.f32 %v629, %v670
      %v672 = vadd.f32 %v666, 1e-05
      %v673 = vrsqrt.pop %v672
      %v674 = vlaneseq
      %v675 = vshrl.u32 %v674, 7
      %v676 = vsub.s32 0, %v675
      %v677 = vrot.slane %v673, %v676
      %v678 = vmul.f32 %v671, %v677
      %v679 = vlaneseq
      %v680 = vshrl.u32 %v679, 7
      %v681 = vsub.s32 0, %v680
      %v682 = vrot.slane %v254, %v681
      %v683 = vmul.f32 %v678, %v682
      %v684 = vlaneseq
      %v685 = vshrl.u32 %v684, 7
      %v686 = vsub.s32 0, %v685
      %v687 = vrot.slane %v255, %v686
      %v688 = vadd.f32 %v683, %v687
      %v689 = vmul.f32 %v688, 0.5
      %v690 = vtanh.pop %v689
      %v691 = vadd.f32 %v690, 1.0
      %v692 = vmul.f32 %v691, 0.5
      %v693 = vlaneseq
      %v694 = vshrl.u32 %v693, 7
      %v695 = vsub.s32 0, %v694
      %v696 = vrot.slane %v256, %v695
      %v697 = vmul.f32 %v692, %v696
      %vm698 = vcmask 130048
      %v699 = vsel %vm698, %v697, 0.0
      %700 = vadd.xlane.f32.xlu0 %v699
      %v701 = vpop.xlane.xlu0 %700
      %v702 = vlaneseq
      %v703 = vshrl.u32 %v702, 7
      %v704 = vsub.s32 0, %v703
      %v705 = vrot.slane %v257, %v704
      %v706 = vadd.f32 %v701, %v705
      %v707 = vmul.f32 %v706, 0.5
      %v708 = vtanh.pop %v707
      %v709 = vadd.f32 %v708, 1.0
      %v710 = vmul.f32 %v709, 0.5
      %vm711 = vcmask 7168
      %712 = vst.msk [vmem:[%s233] sm:$0xff] %vm711, %v710
      %p713 = scmp.lt.s32.totalorder %s23, 1
      %s714 = scalar_select %p713, %s23, 1
      %s715 = smul.addr %s714, 8
      %s716 = scalar_lea.vmem %s6, %s715
      // Predicated region
      $region57: #{tpu_custom_call.1} parent=39 // pred_check
        %p717 = pneg %p158
      $region58: #{tpu_custom_call.1} parent=39 // pred_check_branch
        %719 = sbr.rel (%p717) target = $region60
      $region59: #{tpu_custom_call.1} parent=39 // pred_region
        _
      $region60: #{tpu_custom_call.1} parent=39 // pred_fallthru
        _
    $region40: #{tpu_custom_call.1} parent=5 // pred_fallthru
      _
    %p720 = scmp.le.s32.totalorder 2, %s13
    // Predicated region
    $region61: #{tpu_custom_call.1} parent=5 // pred_check
      %p721 = pneg %p720
    $region62: #{tpu_custom_call.1} parent=5 // pred_check_branch
      %723 = sbr.rel (%p721) target = $region64
    $region63: #{tpu_custom_call.1} parent=5 // pred_region
      %s724 = ssub.s32 %s13, 2
      // Predicated region
      $region65: #{tpu_custom_call.1} parent=63 // pred_check
        %p725 = pneg %p164
      $region66: #{tpu_custom_call.1} parent=63 // pred_check_branch
        %727 = sbr.rel (%p725) target = $region68
      $region67: #{tpu_custom_call.1} parent=63 // pred_region
        %p728 = scmp.lt.s32.totalorder %s25, 1
        %s729 = scalar_select %p728, %s25, 1
        %s730 = smul.addr %s729, 8
        %s731 = scalar_lea.vmem %s6, %s730
      $region68: #{tpu_custom_call.1} parent=63 // pred_fallthru
        _
    $region64: #{tpu_custom_call.1} parent=5 // pred_fallthru
      _
  $region6: #{tpu_custom_call.1} parent=0 // loop_footer
    %s17 = sadd.s32 1, %s13
  $region7: #{tpu_custom_call.1} parent=0 // loop_footer_branch
    %12 = sbr.rel target = $region3
  $region8: #{tpu_custom_call.1} parent=0 // loop_exit
    _

</llo_original>
